<compile_context>
chip_gen: v5e
topology: v5e:2x2
jax: 0.10.0
libtpu: 0.0.40
codegen_flags: <defaults>
</compile_context>

<pallas_src>
import jax
import jax.numpy as jnp
from jax.experimental import pallas as pl
from jax.experimental.pallas import tpu as pltpu

K_IN = 28 * 28   # 784 contraction dim (full last dim of the x block; no HBM pad)
H_DIM = 128      # hidden width (lane-aligned)
N_PAD = 128      # padded output dim (from 10) -> lane-dense stores
MAX_TB = 2048    # max batch-tile rows; worst-case VMEM ~23 MiB incl. double buffers


def _round_up(x, m):
    return ((x + m - 1) // m) * m


def _pick_tb(rows):
    """Batch tile: multiple of 8, <= MAX_TB, <= the 8-aligned array extent,
    and small enough to give >=2 grid steps when possible (v7x megacore)."""
    tb = min(MAX_TB, _round_up(pl.cdiv(rows, 2), 8), (rows // 8) * 8)
    return max(tb, 8)


def _mlp_kernel(x_ref, w1_ref, b1_ref, w2_ref, b2_ref, o_ref):
    # Cast the f32 input tile to bf16 in VMEM (VPU work, hidden under the DMA).
    x = x_ref[...].astype(jnp.bfloat16)
    # Hidden layer: (tb, 784)bf16 @ (784, 128)bf16 -> f32 accum, bias + ReLU in f32.
    h = jnp.dot(x, w1_ref[...], preferred_element_type=jnp.float32)
    h = jnp.maximum(h + b1_ref[...], 0.0)
    # Output layer: bf16 MXU feed, f32 accumulation, bf16 writeback.
    out = jnp.dot(h.astype(jnp.bfloat16), w2_ref[...],
                  preferred_element_type=jnp.float32)
    o_ref[...] = (out + b2_ref[...]).astype(o_ref.dtype)


def pack_params(w1, b1, w2, b2):
    """One-time weight packing (bf16 cast + lane padding). Keep outside the
    per-forward path so it isn't repeated every call."""
    w1_p = w1.astype(jnp.bfloat16)                                          # (784, 128)
    w2_p = jnp.pad(w2, ((0, 0), (0, N_PAD - w2.shape[1]))).astype(jnp.bfloat16)  # (128, 128)
    b1_p = b1.reshape(1, H_DIM).astype(jnp.float32)                         # (1, 128)
    b2_p = jnp.pad(b2.reshape(1, -1),
                   ((0, 0), (0, N_PAD - b2.shape[0]))).astype(jnp.float32)  # (1, 128)
    return w1_p, b1_p, w2_p, b2_p


def fashion_dnn_forward(x, packed_params):
    """x: [B, 1, 28, 28] float32 (NCHW). Returns logits [B, 10] float32."""
    w1_p, b1_p, w2_p, b2_p = packed_params
    B = x.shape[0]
    x2 = x.reshape(B, -1)                      # (B, 784); contiguous, metadata-only
    assert x2.shape[1] == K_IN

    # Sublane minimum: only tiny batches need an explicit (cheap) row pad.
    if B < 8:
        x2 = jnp.pad(x2, ((0, 8 - B), (0, 0)))
    rows = x2.shape[0]

    tb = _pick_tb(rows)
    grid = (pl.cdiv(rows, tb),)                # boundary block clipped by Pallas

    out = pl.pallas_call(
        _mlp_kernel,
        out_shape=jax.ShapeDtypeStruct((rows, N_PAD), jnp.bfloat16),
        grid=grid,
        in_specs=[
            pl.BlockSpec((tb, K_IN), lambda i: (i, 0)),      # x: f32, streamed per tile
            pl.BlockSpec((K_IN, H_DIM), lambda i: (0, 0)),   # w1: bf16, resident
            pl.BlockSpec((1, H_DIM), lambda i: (0, 0)),      # b1: f32, resident
            pl.BlockSpec((H_DIM, N_PAD), lambda i: (0, 0)),  # w2: bf16, resident
            pl.BlockSpec((1, N_PAD), lambda i: (0, 0)),      # b2: f32, resident
        ],
        out_specs=pl.BlockSpec((tb, N_PAD), lambda i: (i, 0)),
        compiler_params=pltpu.CompilerParams(
            dimension_semantics=("parallel",),               # megacore split on v7x
            vmem_limit_bytes=48 * 1024 * 1024,               # fits v5e/v6e/v7x
        ),
    )(x2, w1_p, b1_p, w2_p, b2_p)

    # Drop the (tiny) batch pad and the 10->128 lane padding of the logits.
    return out[:B, :10].astype(jnp.float32)


def init_params(key):
    """Deterministic init mirroring nn.Linear defaults: U(-1/sqrt(fan_in), +1/sqrt(fan_in))."""
    k1, k2, k3, k4 = jax.random.split(key, 4)
    in1, out1 = K_IN, 128
    in2, out2 = 128, 10
    bound1 = 1.0 / jnp.sqrt(in1)
    bound2 = 1.0 / jnp.sqrt(in2)
    w1 = jax.random.uniform(k1, (in1, out1), jnp.float32, -bound1, bound1)
    b1 = jax.random.uniform(k2, (out1,), jnp.float32, -bound1, bound1)
    w2 = jax.random.uniform(k3, (in2, out2), jnp.float32, -bound2, bound2)
    b2 = jax.random.uniform(k4, (out2,), jnp.float32, -bound2, bound2)
    return w1, b1, w2, b2


def _reference(x, w1, b1, w2, b2):
    x_flat = x.reshape(x.shape[0], -1)
    return jnp.maximum(x_flat @ w1 + b1, 0.0) @ w2 + b2


if __name__ == "__main__":
    key = jax.random.PRNGKey(0)
    kx1, kx2, kp = jax.random.split(key, 3)

    w1, b1, w2, b2 = init_params(kp)
    packed = pack_params(w1, b1, w2, b2)
    fwd = jax.jit(fashion_dnn_forward)

    # Case 1: small batch (B=2 < 8 sublanes; grid = (1,)).
    x_small = jax.random.normal(kx1, (2, 1, 28, 28), jnp.float32)
    logits_small = jax.block_until_ready(fwd(x_small, packed))
    ref_small = _reference(x_small, w1, b1, w2, b2)
    assert logits_small.shape == (2, 10)
    assert jnp.allclose(logits_small, ref_small, atol=5e-2, rtol=5e-2), (
        f"max abs err {jnp.max(jnp.abs(logits_small - ref_small))}")

    # Case 2: multi-tile batch, not a multiple of 8 (exercises grid>1 and the
    # clipped boundary block on both the input read and output store).
    x_multi = jax.random.normal(kx2, (20, 1, 28, 28), jnp.float32)
    logits_multi = jax.block_until_ready(fwd(x_multi, packed))
    ref_multi = _reference(x_multi, w1, b1, w2, b2)
    assert logits_multi.shape == (20, 10)
    assert jnp.allclose(logits_multi, ref_multi, atol=5e-2, rtol=5e-2), (
        f"max abs err {jnp.max(jnp.abs(logits_multi - ref_multi))}")

    print("KERNEL_OK")
</pallas_src>

<mosaic_0001>
module attributes {stable_mosaic.version = 11 : i64} {
  func.func @_mlp_kernel(%arg0: i32, %arg1: memref<8x784xf32, #tpu.memory_space<vmem>>, %arg2: memref<784x128xbf16, #tpu.memory_space<vmem>>, %arg3: memref<1x128xf32, #tpu.memory_space<vmem>>, %arg4: memref<128x128xbf16, #tpu.memory_space<vmem>>, %arg5: memref<1x128xf32, #tpu.memory_space<vmem>>, %arg6: memref<8x128xbf16, #tpu.memory_space<vmem>>) attributes {dimension_semantics = [#tpu.dimension_semantics<parallel>], iteration_bounds = array<i64: 1>, scalar_prefetch = 0 : i64, scratch_operands = 0 : i64, tpu.core_type = #tpu.core_type<tc>, window_params = [{transform_indices = @transform_0, window_bounds = array<i64: 8, 784>}, {pipeline_mode = #tpu.pipeline_mode<synchronous>, transform_indices = @transform_1, window_bounds = array<i64: 784, 128>}, {pipeline_mode = #tpu.pipeline_mode<synchronous>, transform_indices = @transform_2, window_bounds = array<i64: 1, 128>}, {pipeline_mode = #tpu.pipeline_mode<synchronous>, transform_indices = @transform_3, window_bounds = array<i64: 128, 128>}, {pipeline_mode = #tpu.pipeline_mode<synchronous>, transform_indices = @transform_4, window_bounds = array<i64: 1, 128>}, {transform_indices = @transform_5, window_bounds = array<i64: 8, 128>}]} {
    %c0 = arith.constant 0 : index
    %c0_0 = arith.constant 0 : index
    %0 = vector.load %arg1[%c0, %c0_0] : memref<8x784xf32, #tpu.memory_space<vmem>>, vector<8x784xf32>
    %1 = arith.truncf %0 : vector<8x784xf32> to vector<8x784xbf16>
    %c0_1 = arith.constant 0 : index
    %c0_2 = arith.constant 0 : index
    %2 = vector.load %arg2[%c0_1, %c0_2] : memref<784x128xbf16, #tpu.memory_space<vmem>>, vector<784x128xbf16>
    %cst = arith.constant dense<0.000000e+00> : vector<8x128xf32>
    %3 = tpu.matmul %1, %2, %cst {dimension_numbers = #tpu.dot_dimension_numbers<[1], [0], [0], [1], [0, 0, 1, 1], [], []>} : vector<8x784xbf16>, vector<784x128xbf16>, vector<8x128xf32> -> vector<8x128xf32>
    %c0_3 = arith.constant 0 : index
    %c0_4 = arith.constant 0 : index
    %4 = vector.load %arg3[%c0_3, %c0_4] : memref<1x128xf32, #tpu.memory_space<vmem>>, vector<1x128xf32>
    %5 = vector.broadcast %4 : vector<1x128xf32> to vector<8x128xf32>
    %6 = arith.addf %3, %5 : vector<8x128xf32>
    %cst_5 = arith.constant 0.000000e+00 : f32
    %7 = vector.broadcast %cst_5 : f32 to vector<8x128xf32>
    %8 = arith.maximumf %6, %7 : vector<8x128xf32>
    %9 = arith.truncf %8 : vector<8x128xf32> to vector<8x128xbf16>
    %c0_6 = arith.constant 0 : index
    %c0_7 = arith.constant 0 : index
    %10 = vector.load %arg4[%c0_6, %c0_7] : memref<128x128xbf16, #tpu.memory_space<vmem>>, vector<128x128xbf16>
    %cst_8 = arith.constant dense<0.000000e+00> : vector<8x128xf32>
    %11 = tpu.matmul %9, %10, %cst_8 {dimension_numbers = #tpu.dot_dimension_numbers<[1], [0], [0], [1], [0, 0, 1, 1], [], []>} : vector<8x128xbf16>, vector<128x128xbf16>, vector<8x128xf32> -> vector<8x128xf32>
    %c0_9 = arith.constant 0 : index
    %c0_10 = arith.constant 0 : index
    %12 = vector.load %arg5[%c0_9, %c0_10] : memref<1x128xf32, #tpu.memory_space<vmem>>, vector<1x128xf32>
    %13 = vector.broadcast %12 : vector<1x128xf32> to vector<8x128xf32>
    %14 = arith.addf %11, %13 : vector<8x128xf32>
    %15 = arith.truncf %14 : vector<8x128xf32> to vector<8x128xbf16>
    %c0_11 = arith.constant 0 : index
    %c0_12 = arith.constant 0 : index
    %16 = vector.load %arg6[%c0_11, %c0_12] : memref<8x128xbf16, #tpu.memory_space<vmem>>, vector<8x128xbf16>
    tpu.vector_store %arg6[%c0_11, %c0_12], %15 {strides = array<i32>} : memref<8x128xbf16, #tpu.memory_space<vmem>>, vector<8x128xbf16>,
    return
  }
  func.func @transform_0(%arg0: i32) -> (i32, i32) {
    %c0_i32 = arith.constant 0 : i32
    %c0_i32_0 = arith.constant 0 : i32
    return %arg0, %c0_i32 : i32, i32
  }
  func.func @transform_1(%arg0: i32) -> (i32, i32) {
    %c0_i32 = arith.constant 0 : i32
    %c0_i32_0 = arith.constant 0 : i32
    %c0_i32_1 = arith.constant 0 : i32
    return %c0_i32, %c0_i32_0 : i32, i32
  }
  func.func @transform_2(%arg0: i32) -> (i32, i32) {
    %c0_i32 = arith.constant 0 : i32
    %c0_i32_0 = arith.constant 0 : i32
    %c0_i32_1 = arith.constant 0 : i32
    return %c0_i32, %c0_i32_0 : i32, i32
  }
  func.func @transform_3(%arg0: i32) -> (i32, i32) {
    %c0_i32 = arith.constant 0 : i32
    %c0_i32_0 = arith.constant 0 : i32
    %c0_i32_1 = arith.constant 0 : i32
    return %c0_i32, %c0_i32_0 : i32, i32
  }
  func.func @transform_4(%arg0: i32) -> (i32, i32) {
    %c0_i32 = arith.constant 0 : i32
    %c0_i32_0 = arith.constant 0 : i32
    %c0_i32_1 = arith.constant 0 : i32
    return %c0_i32, %c0_i32_0 : i32, i32
  }
  func.func @transform_5(%arg0: i32) -> (i32, i32) {
    %c0_i32 = arith.constant 0 : i32
    %c0_i32_0 = arith.constant 0 : i32
    return %arg0, %c0_i32 : i32, i32
  }
}

</mosaic_0001>

<llo_original>
// kernel: fashion_dnn_forward.1
$region0: #{fashion_dnn_forward.1}
  #allocation0 [shape = 'u32[]', space=smem, size = 0x4, offset = 0x4, fixed_abs, tag = 'smem constant byte address 0x4 - core index']
  #allocation1 [shape = 'u32[72,128]{1,0:T(1,128)}', space=vmem, size = 0x9000, scoped, tag = 'internal scratch']
  %s0 = inlined_call_operand.vmem [shape: f32[8,784], index: 0, kind: input, shape index: {}]
  %s1 = inlined_call_operand.hbm [shape: bf16[784,128], index: 1, kind: input, shape index: {}]
  %s2 = inlined_call_operand.vmem [shape: f32[1,128], index: 2, kind: input, shape index: {}]
  %s3 = inlined_call_operand.vmem [shape: bf16[128,128], index: 3, kind: input, shape index: {}]
  %s4 = inlined_call_operand.vmem [shape: f32[1,128], index: 4, kind: input, shape index: {}]
  %s5 = inlined_call_operand.vmem [shape: bf16[8,128], index: 5, kind: output, shape index: {}]
  %s6 = sld [smem:[#allocation0]]
  $region34: #{fashion_dnn_forward.1} parent=0
    _
  %s8 = ssub.s32 1, %s6
  %s9 = scalar_select 0, %s8, %s6
  $region1: #{fashion_dnn_forward.1} parent=0
    #allocation2 [shape = 'u8[200704]{0}', space=vmem, size = 0x31000, scoped, tag = 'input window, operand 1, single buffered']
    #allocation3 [shape = 's32[1]{0}', space=sflag, size = 0x4, scoped, tag = 'scoped memory for fashion_dnn_forward.1']
    %10 = vsyncpa [#allocation3], 0
    // Predicated region
    $region2: #{fashion_dnn_forward.1} parent=1 // pred_check
      _
    $region3: #{fashion_dnn_forward.1} parent=1 // pred_check_branch
      %12 = sbr.rel (0) target = $region5
    $region4: #{fashion_dnn_forward.1} parent=1 // pred_region
      _
    $region5: #{fashion_dnn_forward.1} parent=1 // pred_fallthru
      _
    // Predicated region
    $region6: #{fashion_dnn_forward.1} parent=1 // pred_check
      _
    $region7: #{fashion_dnn_forward.1} parent=1 // pred_check_branch
      %14 = sbr.rel (0) target = $region9
    $region8: #{fashion_dnn_forward.1} parent=1 // pred_region
      %16 = vsyncadd [#allocation3], 0
      %s17 = sshll.u32 %s1, 4
      %s18 = int_to_ptr.hbm [resolvable:$true] %s17
      %s19 = sshll.u32 [#allocation2], 4
      %s20 = int_to_ptr.vmem [resolvable:$true] %s19
      %25 = dma.hbm_to_vmem [thread:$0]  %s18, 6272, %s20, [#allocation3], 64, 64, 4
    $region9: #{fashion_dnn_forward.1} parent=1 // pred_fallthru
      _
    // Predicated region
    $region10: #{fashion_dnn_forward.1} parent=1 // pred_check
      _
    $region11: #{fashion_dnn_forward.1} parent=1 // pred_check_branch
      %27 = sbr.rel (0) target = $region13
    $region12: #{fashion_dnn_forward.1} parent=1 // pred_region
      _
    $region13: #{fashion_dnn_forward.1} parent=1 // pred_fallthru
      _
    // Predicated region
    $region14: #{fashion_dnn_forward.1} parent=1 // pred_check
      _
    $region15: #{fashion_dnn_forward.1} parent=1 // pred_check_branch
      %29 = sbr.rel (0) target = $region17
    $region16: #{fashion_dnn_forward.1} parent=1 // pred_region
      _
    $region17: #{fashion_dnn_forward.1} parent=1 // pred_fallthru
      _
    // Predicated region
    $region18: #{fashion_dnn_forward.1} parent=1 // pred_check
      _
    $region19: #{fashion_dnn_forward.1} parent=1 // pred_check_branch
      %31 = sbr.rel (0) target = $region21
    $region20: #{fashion_dnn_forward.1} parent=1 // pred_region
      _
    $region21: #{fashion_dnn_forward.1} parent=1 // pred_fallthru
      _
    // Predicated region
    $region22: #{fashion_dnn_forward.1} parent=1 // pred_check
      _
    $region23: #{fashion_dnn_forward.1} parent=1 // pred_check_branch
      %33 = sbr.rel (0) target = $region25
    $region24: #{fashion_dnn_forward.1} parent=1 // pred_region
      %35 = dma.done [#allocation3], 6272
    $region25: #{fashion_dnn_forward.1} parent=1 // pred_fallthru
      _
    %v37 = vld [vmem:[%s0] sm:$0xff]
    %v38 = vld [vmem:[%s0 + $0x8] sm:$0xff]
    %v39 = vld [vmem:[%s0 + $0x10] sm:$0xff]
    %v40 = vld [vmem:[%s0 + $0x18] sm:$0xff]
    %v41 = vld [vmem:[%s0 + $0x20] sm:$0xff]
    %v42 = vld [vmem:[%s0 + $0x28] sm:$0xff]
    %v43 = vld [vmem:[%s0 + $0x30] sm:$0xff]
    %v44 = vpack.c.bf16 %v37, %v37
    %v45 = vpack.c.bf16 %v38, %v38
    %v46 = vpack.c.bf16 %v39, %v39
    %v47 = vpack.c.bf16 %v40, %v40
    %v48 = vpack.c.bf16 %v41, %v41
    %v49 = vpack.c.bf16 %v42, %v42
    %v50 = vpack.c.bf16 %v43, %v43
    %v51 = vld [vmem:[#allocation2] sm:$0xf]
    %v52 = vld [vmem:[#allocation2 + $0x4] sm:$0xf]
    %v53 = vld [vmem:[#allocation2 + $0x8] sm:$0xf]
    %v54 = vld [vmem:[#allocation2 + $0xc] sm:$0xf]
    %v55 = vld [vmem:[#allocation2 + $0x10] sm:$0xf]
    %v56 = vld [vmem:[#allocation2 + $0x14] sm:$0xf]
    %v57 = vld [vmem:[#allocation2 + $0x18] sm:$0xf]
    %v58 = vld [vmem:[#allocation2 + $0x1c] sm:$0xf]
    %v59 = vld [vmem:[#allocation2 + $0x20] sm:$0xf]
    %v60 = vld [vmem:[#allocation2 + $0x24] sm:$0xf]
    %v61 = vld [vmem:[#allocation2 + $0x28] sm:$0xf]
    %v62 = vld [vmem:[#allocation2 + $0x2c] sm:$0xf]
    %v63 = vld [vmem:[#allocation2 + $0x30] sm:$0xf]
    %v64 = vld [vmem:[#allocation2 + $0x34] sm:$0xf]
    %v65 = vld [vmem:[#allocation2 + $0x38] sm:$0xf]
    %v66 = vld [vmem:[#allocation2 + $0x3c] sm:$0xf]
    %v67 = vld [vmem:[#allocation2 + $0x40] sm:$0xf]
    %v68 = vld [vmem:[#allocation2 + $0x44] sm:$0xf]
    %v69 = vld [vmem:[#allocation2 + $0x48] sm:$0xf]
    %v70 = vld [vmem:[#allocation2 + $0x4c] sm:$0xf]
    %v71 = vld [vmem:[#allocation2 + $0x50] sm:$0xf]
    %v72 = vld [vmem:[#allocation2 + $0x54] sm:$0xf]
    %v73 = vld [vmem:[#allocation2 + $0x58] sm:$0xf]
    %v74 = vld [vmem:[#allocation2 + $0x5c] sm:$0xf]
    %v75 = vld [vmem:[#allocation2 + $0x60] sm:$0xf]
    %v76 = vld [vmem:[#allocation2 + $0x64] sm:$0xf]
    %v77 = vld [vmem:[#allocation2 + $0x68] sm:$0xf]
    %v78 = vld [vmem:[#allocation2 + $0x6c] sm:$0xf]
    %v79 = vld [vmem:[#allocation2 + $0x70] sm:$0xf]
    %v80 = vld [vmem:[#allocation2 + $0x74] sm:$0xf]
    %v81 = vld [vmem:[#allocation2 + $0x78] sm:$0xf]
    %v82 = vld [vmem:[#allocation2 + $0x7c] sm:$0xf]
    %v83 = vld [vmem:[#allocation2 + $0x80] sm:$0xf]
    %v84 = vld [vmem:[#allocation2 + $0x84] sm:$0xf]
    %v85 = vld [vmem:[#allocation2 + $0x88] sm:$0xf]
    %v86 = vld [vmem:[#allocation2 + $0x8c] sm:$0xf]
    %v87 = vld [vmem:[#allocation2 + $0x90] sm:$0xf]
    %v88 = vld [vmem:[#allocation2 + $0x94] sm:$0xf]
    %v89 = vld [vmem:[#allocation2 + $0x98] sm:$0xf]
    %v90 = vld [vmem:[#allocation2 + $0x9c] sm:$0xf]
    %v91 = vld [vmem:[#allocation2 + $0xa0] sm:$0xf]
    %v92 = vld [vmem:[#allocation2 + $0xa4] sm:$0xf]
    %v93 = vld [vmem:[#allocation2 + $0xa8] sm:$0xf]
    %v94 = vld [vmem:[#allocation2 + $0xac] sm:$0xf]
    %v95 = vld [vmem:[#allocation2 + $0xb0] sm:$0xf]
    %v96 = vld [vmem:[#allocation2 + $0xb4] sm:$0xf]
    %v97 = vld [vmem:[#allocation2 + $0xb8] sm:$0xf]
    %v98 = vld [vmem:[#allocation2 + $0xbc] sm:$0xf]
    %v99 = vld [vmem:[#allocation2 + $0xc0] sm:$0xf]
    %v100 = vld [vmem:[#allocation2 + $0xc4] sm:$0xf]
    %v101 = vld [vmem:[#allocation2 + $0xc8] sm:$0xf]
    %v102 = vld [vmem:[#allocation2 + $0xcc] sm:$0xf]
    %v103 = vld [vmem:[#allocation2 + $0xd0] sm:$0xf]
    %v104 = vld [vmem:[#allocation2 + $0xd4] sm:$0xf]
    %v105 = vld [vmem:[#allocation2 + $0xd8] sm:$0xf]
    %v106 = vld [vmem:[#allocation2 + $0xdc] sm:$0xf]
    %v107 = vld [vmem:[#allocation2 + $0xe0] sm:$0xf]
    %v108 = vld [vmem:[#allocation2 + $0xe4] sm:$0xf]
    %v109 = vld [vmem:[#allocation2 + $0xe8] sm:$0xf]
    %v110 = vld [vmem:[#allocation2 + $0xec] sm:$0xf]
    %v111 = vld [vmem:[#allocation2 + $0xf0] sm:$0xf]
    %v112 = vld [vmem:[#allocation2 + $0xf4] sm:$0xf]
    %v113 = vld [vmem:[#allocation2 + $0xf8] sm:$0xf]
    %v114 = vld [vmem:[#allocation2 + $0xfc] sm:$0xf]
    %v115 = vld [vmem:[#allocation2 + $0x100] sm:$0xf]
    %v116 = vld [vmem:[#allocation2 + $0x104] sm:$0xf]
    %v117 = vld [vmem:[#allocation2 + $0x108] sm:$0xf]
    %v118 = vld [vmem:[#allocation2 + $0x10c] sm:$0xf]
    %v119 = vld [vmem:[#allocation2 + $0x110] sm:$0xf]
    %v120 = vld [vmem:[#allocation2 + $0x114] sm:$0xf]
    %v121 = vld [vmem:[#allocation2 + $0x118] sm:$0xf]
    %v122 = vld [vmem:[#allocation2 + $0x11c] sm:$0xf]
    %v123 = vld [vmem:[#allocation2 + $0x120] sm:$0xf]
    %v124 = vld [vmem:[#allocation2 + $0x124] sm:$0xf]
    %v125 = vld [vmem:[#allocation2 + $0x128] sm:$0xf]
    %v126 = vld [vmem:[#allocation2 + $0x12c] sm:$0xf]
    %v127 = vld [vmem:[#allocation2 + $0x130] sm:$0xf]
    %v128 = vld [vmem:[#allocation2 + $0x134] sm:$0xf]
    %v129 = vld [vmem:[#allocation2 + $0x138] sm:$0xf]
    %v130 = vld [vmem:[#allocation2 + $0x13c] sm:$0xf]
    %v131 = vld [vmem:[#allocation2 + $0x140] sm:$0xf]
    %v132 = vld [vmem:[#allocation2 + $0x144] sm:$0xf]
    %v133 = vld [vmem:[#allocation2 + $0x148] sm:$0xf]
    %v134 = vld [vmem:[#allocation2 + $0x14c] sm:$0xf]
    %v135 = vld [vmem:[#allocation2 + $0x150] sm:$0xf]
    %v136 = vld [vmem:[#allocation2 + $0x154] sm:$0xf]
    %v137 = vld [vmem:[#allocation2 + $0x158] sm:$0xf]
    %v138 = vld [vmem:[#allocation2 + $0x15c] sm:$0xf]
    %v139 = vld [vmem:[#allocation2 + $0x160] sm:$0xf]
    %v140 = vld [vmem:[#allocation2 + $0x164] sm:$0xf]
    %v141 = vld [vmem:[#allocation2 + $0x168] sm:$0xf]
    %v142 = vld [vmem:[#allocation2 + $0x16c] sm:$0xf]
    %v143 = vld [vmem:[#allocation2 + $0x170] sm:$0xf]
    %v144 = vld [vmem:[#allocation2 + $0x174] sm:$0xf]
    %v145 = vld [vmem:[#allocation2 + $0x178] sm:$0xf]
    %v146 = vld [vmem:[#allocation2 + $0x17c] sm:$0xf]
    %v147 = vld [vmem:[#allocation2 + $0x180] sm:$0xf]
    %v148 = vld [vmem:[#allocation2 + $0x184] sm:$0xf]
    %v149 = vld [vmem:[%s2] sm:$0x1]
    %v151 = vperm.slane %v149, 0
    %v251 = vunpack.c.l.b16 %v51
    %v252 = vunpack.c.l.b16 %v52
    %v253 = vunpack.c.l.b16 %v53
    %v254 = vunpack.c.l.b16 %v54
    %v255 = vunpack.c.l.b16 %v55
    %v256 = vunpack.c.l.b16 %v56
    %v257 = vunpack.c.l.b16 %v57
    %v258 = vunpack.c.l.b16 %v58
    %v259 = vunpack.c.l.b16 %v59
    %v260 = vunpack.c.l.b16 %v60
    %v261 = vunpack.c.l.b16 %v61
    %v262 = vunpack.c.l.b16 %v62
    %v263 = vunpack.c.l.b16 %v63
    %v264 = vunpack.c.l.b16 %v64
    %v265 = vunpack.c.l.b16 %v65
    %v266 = vunpack.c.l.b16 %v66
    %v267 = vunpack.c.l.b16 %v67
    %v268 = vunpack.c.l.b16 %v68
    %v269 = vunpack.c.l.b16 %v69
    %v270 = vunpack.c.l.b16 %v70
    %v271 = vunpack.c.l.b16 %v71
    %v272 = vunpack.c.l.b16 %v72
    %v273 = vunpack.c.l.b16 %v73
    %v274 = vunpack.c.l.b16 %v74
    %v275 = vunpack.c.l.b16 %v75
    %v276 = vunpack.c.l.b16 %v76
    %v277 = vunpack.c.l.b16 %v77
    %v278 = vunpack.c.l.b16 %v78
    %v279 = vunpack.c.l.b16 %v79
    %v280 = vunpack.c.l.b16 %v80
    %v281 = vunpack.c.l.b16 %v81
    %v282 = vunpack.c.l.b16 %v82
    %v283 = vunpack.c.l.b16 %v83
    %v284 = vunpack.c.l.b16 %v84
    %v285 = vunpack.c.l.b16 %v85
    %v286 = vunpack.c.l.b16 %v86
    %v287 = vunpack.c.l.b16 %v87
    %v288 = vunpack.c.l.b16 %v88
    %v289 = vunpack.c.l.b16 %v89
    %v290 = vunpack.c.l.b16 %v90
    %v291 = vunpack.c.l.b16 %v91
    %v292 = vunpack.c.l.b16 %v92
    %v293 = vunpack.c.l.b16 %v93
    %v294 = vunpack.c.l.b16 %v94
    %v295 = vunpack.c.l.b16 %v95
    %v296 = vunpack.c.l.b16 %v96
    %v297 = vunpack.c.l.b16 %v97
    %v298 = vunpack.c.l.b16 %v98
    %v299 = vunpack.c.l.b16 %v99
    %v300 = vunpack.c.l.b16 %v100
    %v301 = vunpack.c.l.b16 %v101
    %v302 = vunpack.c.l.b16 %v102
    %v303 = vunpack.c.l.b16 %v103
    %v304 = vunpack.c.l.b16 %v104
    %v305 = vunpack.c.l.b16 %v105
    %v306 = vunpack.c.l.b16 %v106
    %v307 = vunpack.c.l.b16 %v107
    %v308 = vunpack.c.l.b16 %v108
    %v309 = vunpack.c.l.b16 %v109
    %v310 = vunpack.c.l.b16 %v110
    %v311 = vunpack.c.l.b16 %v111
    %v312 = vunpack.c.l.b16 %v112
    %v313 = vunpack.c.l.b16 %v113
    %v314 = vunpack.c.l.b16 %v114
    %v315 = vunpack.c.l.b16 %v115
    %v316 = vunpack.c.l.b16 %v116
    %v317 = vunpack.c.l.b16 %v117
    %v318 = vunpack.c.l.b16 %v118
    %v319 = vunpack.c.l.b16 %v119
    %v320 = vunpack.c.l.b16 %v120
    %v321 = vunpack.c.l.b16 %v121
    %v322 = vunpack.c.l.b16 %v122
    %v323 = vunpack.c.l.b16 %v123
    %v324 = vunpack.c.l.b16 %v124
    %v325 = vunpack.c.l.b16 %v125
    %v326 = vunpack.c.l.b16 %v126
    %v327 = vunpack.c.l.b16 %v127
    %v328 = vunpack.c.l.b16 %v128
    %v329 = vunpack.c.l.b16 %v129
    %v330 = vunpack.c.l.b16 %v130
    %v331 = vunpack.c.l.b16 %v131
    %v332 = vunpack.c.l.b16 %v132
    %v333 = vunpack.c.l.b16 %v133
    %v334 = vunpack.c.l.b16 %v134
    %v335 = vunpack.c.l.b16 %v135
    %v336 = vunpack.c.l.b16 %v136
    %v337 = vunpack.c.l.b16 %v137
    %v338 = vunpack.c.l.b16 %v138
    %v339 = vunpack.c.l.b16 %v139
    %v340 = vunpack.c.l.b16 %v140
    %v341 = vunpack.c.l.b16 %v141
    %v342 = vunpack.c.l.b16 %v142
    %v343 = vunpack.c.l.b16 %v143
    %v344 = vunpack.c.l.b16 %v144
    %v345 = vunpack.c.l.b16 %v145
    %v346 = vunpack.c.l.b16 %v146
    %v347 = vunpack.c.l.b16 %v147
    %v348 = vunpack.c.l.b16 %v148
    %v349 = vpack.c.b16 %v252, %v251
    %v350 = vpack.c.b16 %v254, %v253
    %v351 = vpack.c.b16 %v256, %v255
    %v352 = vpack.c.b16 %v258, %v257
    %v353 = vpack.c.b16 %v260, %v259
    %v354 = vpack.c.b16 %v262, %v261
    %v355 = vpack.c.b16 %v264, %v263
    %v356 = vpack.c.b16 %v266, %v265
    %v357 = vpack.c.b16 %v268, %v267
    %v358 = vpack.c.b16 %v270, %v269
    %v359 = vpack.c.b16 %v272, %v271
    %v360 = vpack.c.b16 %v274, %v273
    %v361 = vpack.c.b16 %v276, %v275
    %v362 = vpack.c.b16 %v278, %v277
    %v363 = vpack.c.b16 %v280, %v279
    %v364 = vpack.c.b16 %v282, %v281
    %v365 = vpack.c.b16 %v284, %v283
    %v366 = vpack.c.b16 %v286, %v285
    %v367 = vpack.c.b16 %v288, %v287
    %v368 = vpack.c.b16 %v290, %v289
    %v369 = vpack.c.b16 %v292, %v291
    %v370 = vpack.c.b16 %v294, %v293
    %v371 = vpack.c.b16 %v296, %v295
    %v372 = vpack.c.b16 %v298, %v297
    %v373 = vpack.c.b16 %v300, %v299
    %v374 = vpack.c.b16 %v302, %v301
    %v375 = vpack.c.b16 %v304, %v303
    %v376 = vpack.c.b16 %v306, %v305
    %v377 = vpack.c.b16 %v308, %v307
    %v378 = vpack.c.b16 %v310, %v309
    %v379 = vpack.c.b16 %v312, %v311
    %v380 = vpack.c.b16 %v314, %v313
    %v381 = vpack.c.b16 %v316, %v315
    %v382 = vpack.c.b16 %v318, %v317
    %v383 = vpack.c.b16 %v320, %v319
    %v384 = vpack.c.b16 %v322, %v321
    %v385 = vpack.c.b16 %v324, %v323
    %v386 = vpack.c.b16 %v326, %v325
    %v387 = vpack.c.b16 %v328, %v327
    %v388 = vpack.c.b16 %v330, %v329
    %v389 = vpack.c.b16 %v332, %v331
    %v390 = vpack.c.b16 %v334, %v333
    %v391 = vpack.c.b16 %v336, %v335
    %v392 = vpack.c.b16 %v338, %v337
    %v393 = vpack.c.b16 %v340, %v339
    %v394 = vpack.c.b16 %v342, %v341
    %v395 = vpack.c.b16 %v344, %v343
    %v396 = vpack.c.b16 %v346, %v345
    %v397 = vpack.c.b16 %v348, %v347
    %vm447 = vcmask 130048
    %v449 = vsel %vm447, %v50, 0
    %451 = vmatpush.bf16.msra.mxu0 %v356
    %452 = vmatpush.bf16.msra.mxu0 %v355
    %453 = vmatpush.bf16.msra.mxu0 %v354
    %454 = vmatpush.bf16.msra.mxu0 %v353
    %455 = vmatpush.bf16.msra.mxu0 %v352
    %456 = vmatpush.bf16.msra.mxu0 %v351
    %457 = vmatpush.bf16.msra.mxu0 %v350
    %458 = vmatpush.bf16.msra.mxu0 %v349
    %459 = vmatmul.bf16.gmra.mxu0 %v44
    %v460 = vpop.f32.mrf.mxu0
    %v461 = vadd.f32 %v151, %v460
    %v462 = vpop.f32.mrf.mxu0
    %463 = vdwg.mxu0
    %464 = vmatpush.bf16.msra.mxu0 %v364
    %465 = vmatpush.bf16.msra.mxu0 %v363
    %466 = vmatpush.bf16.msra.mxu0 %v362
    %467 = vmatpush.bf16.msra.mxu0 %v361
    %468 = vmatpush.bf16.msra.mxu0 %v360
    %469 = vmatpush.bf16.msra.mxu0 %v359
    %470 = vmatpush.bf16.msra.mxu0 %v358
    %471 = vmatpush.bf16.msra.mxu0 %v357
    %472 = vmatmul.bf16.gmra.mxu0 %v45
    %v473 = vpop.f32.mrf.mxu0
    %v474 = vadd.f32 %v461, %v473
    %v475 = vpop.f32.mrf.mxu0
    %476 = vdwg.mxu0
    %477 = vmatpush.bf16.msra.mxu0 %v372
    %478 = vmatpush.bf16.msra.mxu0 %v371
    %479 = vmatpush.bf16.msra.mxu0 %v370
    %480 = vmatpush.bf16.msra.mxu0 %v369
    %481 = vmatpush.bf16.msra.mxu0 %v368
    %482 = vmatpush.bf16.msra.mxu0 %v367
    %483 = vmatpush.bf16.msra.mxu0 %v366
    %484 = vmatpush.bf16.msra.mxu0 %v365
    %485 = vmatmul.bf16.gmra.mxu0 %v46
    %v486 = vpop.f32.mrf.mxu0
    %v487 = vadd.f32 %v474, %v486
    %v488 = vpop.f32.mrf.mxu0
    %489 = vdwg.mxu0
    %490 = vmatpush.bf16.msra.mxu0 %v380
    %491 = vmatpush.bf16.msra.mxu0 %v379
    %492 = vmatpush.bf16.msra.mxu0 %v378
    %493 = vmatpush.bf16.msra.mxu0 %v377
    %494 = vmatpush.bf16.msra.mxu0 %v376
    %495 = vmatpush.bf16.msra.mxu0 %v375
    %496 = vmatpush.bf16.msra.mxu0 %v374
    %497 = vmatpush.bf16.msra.mxu0 %v373
    %498 = vmatmul.bf16.gmra.mxu0 %v47
    %v499 = vpop.f32.mrf.mxu0
    %v500 = vadd.f32 %v487, %v499
    %v501 = vpop.f32.mrf.mxu0
    %502 = vdwg.mxu0
    %503 = vmatpush.bf16.msra.mxu0 %v388
    %504 = vmatpush.bf16.msra.mxu0 %v387
    %505 = vmatpush.bf16.msra.mxu0 %v386
    %506 = vmatpush.bf16.msra.mxu0 %v385
    %507 = vmatpush.bf16.msra.mxu0 %v384
    %508 = vmatpush.bf16.msra.mxu0 %v383
    %509 = vmatpush.bf16.msra.mxu0 %v382
    %510 = vmatpush.bf16.msra.mxu0 %v381
    %511 = vmatmul.bf16.gmra.mxu0 %v48
    %v512 = vpop.f32.mrf.mxu0
    %v513 = vadd.f32 %v500, %v512
    %v514 = vpop.f32.mrf.mxu0
    %515 = vdwg.mxu0
    %516 = vmatpush.bf16.msra.mxu0 %v396
    %517 = vmatpush.bf16.msra.mxu0 %v395
    %518 = vmatpush.bf16.msra.mxu0 %v394
    %519 = vmatpush.bf16.msra.mxu0 %v393
    %520 = vmatpush.bf16.msra.mxu0 %v392
    %521 = vmatpush.bf16.msra.mxu0 %v391
    %522 = vmatpush.bf16.msra.mxu0 %v390
    %523 = vmatpush.bf16.msra.mxu0 %v389
    %524 = vmatmul.bf16.gmra.mxu0 %v49
    %v525 = vpop.f32.mrf.mxu0
    %v526 = vadd.f32 %v513, %v525
    %v527 = vpop.f32.mrf.mxu0
    %528 = vdwg.mxu0
    %529 = vmatpush.bf16.msra.mxu0 0
    %530 = vmatpush.bf16.msra.mxu0 0
    %531 = vmatpush.bf16.msra.mxu0 0
    %532 = vmatpush.bf16.msra.mxu0 0
    %533 = vmatpush.bf16.msra.mxu0 0
    %534 = vmatpush.bf16.msra.mxu0 0
    %535 = vmatpush.bf16.msra.mxu0 0
    %536 = vmatpush.bf16.msra.mxu0 %v397
    %537 = vmatmul.bf16.gmra.mxu0 %v449
    %v538 = vpop.f32.mrf.mxu0
    %v539 = vadd.f32 %v526, %v538
    %v540 = vpop.f32.mrf.mxu0
    %541 = vdwg.mxu0
    %v542 = vmax.f32 %v539, 0.0
    %v543 = vpack.c.bf16 %v542, %v542
    %v544 = vld [vmem:[%s3] sm:$0xf]
    %v545 = vld [vmem:[%s3 + $0x4] sm:$0xf]
    %v546 = vld [vmem:[%s3 + $0x8] sm:$0xf]
    %v547 = vld [vmem:[%s3 + $0xc] sm:$0xf]
    %v548 = vld [vmem:[%s3 + $0x10] sm:$0xf]
    %v549 = vld [vmem:[%s3 + $0x14] sm:$0xf]
    %v550 = vld [vmem:[%s3 + $0x18] sm:$0xf]
    %v551 = vld [vmem:[%s3 + $0x1c] sm:$0xf]
    %v552 = vld [vmem:[%s3 + $0x20] sm:$0xf]
    %v553 = vld [vmem:[%s3 + $0x24] sm:$0xf]
    %v554 = vld [vmem:[%s3 + $0x28] sm:$0xf]
    %v555 = vld [vmem:[%s3 + $0x2c] sm:$0xf]
    %v556 = vld [vmem:[%s3 + $0x30] sm:$0xf]
    %v557 = vld [vmem:[%s3 + $0x34] sm:$0xf]
    %v558 = vld [vmem:[%s3 + $0x38] sm:$0xf]
    %v559 = vld [vmem:[%s3 + $0x3c] sm:$0xf]
    %v560 = vld [vmem:[%s4] sm:$0x1]
    %v562 = vperm.slane %v560, 0
    %v580 = vunpack.c.l.b16 %v544
    %v581 = vunpack.c.l.b16 %v545
    %v582 = vunpack.c.l.b16 %v546
    %v583 = vunpack.c.l.b16 %v547
    %v584 = vunpack.c.l.b16 %v548
    %v585 = vunpack.c.l.b16 %v549
    %v586 = vunpack.c.l.b16 %v550
    %v587 = vunpack.c.l.b16 %v551
    %v588 = vunpack.c.l.b16 %v552
    %v589 = vunpack.c.l.b16 %v553
    %v590 = vunpack.c.l.b16 %v554
    %v591 = vunpack.c.l.b16 %v555
    %v592 = vunpack.c.l.b16 %v556
    %v593 = vunpack.c.l.b16 %v557
    %v594 = vunpack.c.l.b16 %v558
    %v595 = vunpack.c.l.b16 %v559
    %v596 = vpack.c.b16 %v581, %v580
    %v597 = vpack.c.b16 %v583, %v582
    %v598 = vpack.c.b16 %v585, %v584
    %v599 = vpack.c.b16 %v587, %v586
    %v600 = vpack.c.b16 %v589, %v588
    %v601 = vpack.c.b16 %v591, %v590
    %v602 = vpack.c.b16 %v593, %v592
    %v603 = vpack.c.b16 %v595, %v594
    %612 = vmatpush.bf16.msra.mxu0 %v603
    %613 = vmatpush.bf16.msra.mxu0 %v602
    %614 = vmatpush.bf16.msra.mxu0 %v601
    %615 = vmatpush.bf16.msra.mxu0 %v600
    %616 = vmatpush.bf16.msra.mxu0 %v599
    %617 = vmatpush.bf16.msra.mxu0 %v598
    %618 = vmatpush.bf16.msra.mxu0 %v597
    %619 = vmatpush.bf16.msra.mxu0 %v596
    %620 = vmatmul.bf16.gmra.mxu0 %v543
    %v621 = vpop.f32.mrf.mxu0
    %v622 = vadd.f32 %v562, %v621
    %v623 = vpop.f32.mrf.mxu0
    %624 = vdwg.mxu0
    %v625 = vpack.c.bf16 %v622, %v622
    %626 = vst [vmem:[%s5] sm:$0xf] %v625
    // Predicated region
    $region26: #{fashion_dnn_forward.1} parent=1 // pred_check
      _
    $region27: #{fashion_dnn_forward.1} parent=1 // pred_check_branch
      %628 = sbr.rel (0) target = $region29
    $region28: #{fashion_dnn_forward.1} parent=1 // pred_region
      _
    $region29: #{fashion_dnn_forward.1} parent=1 // pred_fallthru
      _
    // Predicated region
    $region30: #{fashion_dnn_forward.1} parent=1 // pred_check
      _
    $region31: #{fashion_dnn_forward.1} parent=1 // pred_check_branch
      %630 = sbr.rel (0) target = $region33
    $region32: #{fashion_dnn_forward.1} parent=1 // pred_region
      _
    $region33: #{fashion_dnn_forward.1} parent=1 // pred_fallthru
      _
    %631 = vsyncpa [#allocation3], 1

</llo_original>
